<compile_context>
chip_gen: v5e
topology: v5e:2x2
jax: 0.10.0
libtpu: 0.0.40
codegen_flags: <defaults>
</compile_context>

<pallas_src>
import jax
import jax.numpy as jnp
from jax.experimental import pallas as pl
from jax.experimental.pallas import tpu as pltpu

# ---- static configuration (small shapes consistent with the module) ----
HIDDEN = 32                 # hidden_dim == encoder_feature_dim
N = 4                       # cyclic group C4 (regular rep has N channels/field)
OBS_C, OBS_H, OBS_W = 4, 16, 16
ACTION_DIM = 8              # action_shape[0]
B = 2

ENC_IN = OBS_C * OBS_H * OBS_W                   # 1024
ENC_OUT = HIDDEN * N                             # 128  (HIDDEN regular fields)
EXTRA = 2 + (ACTION_DIM - 4) + 2 * 2             # 10   (picker + inv_act + dxy)
CAT_IN = ENC_OUT + EXTRA                         # 138
QWIDE = 2 * ENC_OUT                              # 256  (both Q heads fused)


def _vmem_spec():
    return pl.BlockSpec(memory_space=pltpu.MemorySpace.VMEM)


# ----------------------------- fused Pallas kernel --------------------------

def critic_kernel(obs_ref, extras_ref, enc_w_ref, enc_b_ref,
                  w1_ref, w1t_ref, b1_ref, w2_ref, b2_ref, out_ref):
    # --- encoder ---
    # TODO(synk): make_encoder() source not provided; stand-in equivariant
    # encoder = normalize + flatten + dense + ReLU producing (B, HIDDEN*N).
    x = obs_ref[...] * (1.0 / 255.0)                       # obs / 255.0 in-kernel
    conv = jnp.dot(x.astype(jnp.bfloat16), enc_w_ref[...],
                   preferred_element_type=jnp.float32) + enc_b_ref[...]
    conv = jnp.maximum(conv, 0.0)                          # (B, 128)

    # --- fused Q1/Q2 first R2Conv (1x1 == matmul), concat split away ---
    # cat @ W1  ==  conv_out(128) @ W1[:128]  +  extras(10) @ W1[128:]
    h = jnp.dot(conv.astype(jnp.bfloat16), w1_ref[...],
                preferred_element_type=jnp.float32)        # (B, 256), K=128 aligned
    h = h + jnp.dot(extras_ref[...], w1t_ref[...],
                    preferred_element_type=jnp.float32)    # tiny 10-channel tail
    h = jnp.maximum(h + b1_ref[...], 0.0)                  # escnn ReLU, (B, 256)

    # --- GroupPooling (max over the N=4 group channels of each field) ---
    # W1 columns are permuted group-major at init: col = g*64 + head*32 + f,
    # so pooling is two elementwise maxima of contiguous slices (no relayout).
    m = jnp.maximum(h[:, 0:128], h[:, 128:256])            # max over group bit 1
    pooled = jnp.maximum(m[:, 0:64], m[:, 64:128])         # (B, 64): [Q1 f0..31 | Q2 f0..31]

    # --- final trivial->trivial 1x1 convs as one block-diagonal (64, 2) matmul ---
    out_ref[...] = jnp.dot(pooled, w2_ref[...],
                           preferred_element_type=jnp.float32) + b2_ref[...]


# ----------------------------- wrapper ------------------------------------

def critic_forward(params, obs, picker_state, action):
    bsz = obs.shape[0]
    obs_flat = obs.reshape(bsz, -1).astype(jnp.float32)    # (B, 1024)
    action = action.reshape(bsz, -1)
    picker = picker_state.reshape(bsz, 2)
    dxy = action[:, 0::2]                                  # cols 0,2,4,6
    inv_act = action[:, 1::2]                              # cols 1,3,5,7
    # order matches torch.cat((conv_out, picker_state, inv_act, dxy), dim=1)
    extras = jnp.concatenate([picker, inv_act, dxy], axis=1)   # (B, 10)

    q = pl.pallas_call(
        critic_kernel,
        out_shape=jax.ShapeDtypeStruct((bsz, 2), jnp.float32),
        in_specs=[_vmem_spec()] * 9,
        out_specs=_vmem_spec(),
    )(obs_flat, extras,
      params["enc_w"], params["enc_b"],
      params["w1"], params["w1_tail"], params["b1"],
      params["w2"], params["b2"])

    return q[:, 0:1], q[:, 1:2]


# ----------------------------- params -------------------------------------

def _fuse_group_major(wa, wb):
    """Stack the two heads' weights and permute output columns field-major ->
    group-major: fused column index = g*(2*HIDDEN) + head*HIDDEN + f."""
    rows = wa.shape[0]
    w = jnp.stack([wa, wb], axis=1).reshape(rows, 2, HIDDEN, N)  # (rows, head, f, g)
    w = jnp.transpose(w, (0, 3, 1, 2))                           # (rows, g, head, f)
    return w.reshape(rows, QWIDE)


def init_params(key):
    ks = jax.random.split(key, 6)

    def lin(k, fan_in, fan_out):
        return (jax.random.normal(k, (fan_in, fan_out), jnp.float32)
                * (1.0 / jnp.sqrt(fan_in)))

    # NOTE(synk): escnn's equivariant basis-expanded weights are replaced by
    # deterministic dense weights of identical shapes; forward structure
    # (matmul -> ReLU -> group max-pool -> matmul) is identical.
    enc_w = lin(ks[0], ENC_IN, ENC_OUT)
    enc_b = jnp.zeros((1, ENC_OUT), jnp.float32)

    # per-head first-conv weights, escnn field-major columns (f*N + g)
    q1_w1 = lin(ks[1], CAT_IN, ENC_OUT)
    q2_w1 = lin(ks[2], CAT_IN, ENC_OUT)
    q1_b1 = jnp.zeros((1, ENC_OUT), jnp.float32)
    q2_b1 = jnp.zeros((1, ENC_OUT), jnp.float32)
    q1_w2 = lin(ks[3], HIDDEN, 1)
    q2_w2 = lin(ks[4], HIDDEN, 1)
    q1_b2 = jnp.zeros((1, 1), jnp.float32)
    q2_b2 = jnp.zeros((1, 1), jnp.float32)

    # fuse both heads + group-major permutation; split conv part / extras tail
    w1_full = _fuse_group_major(q1_w1, q2_w1)            # (138, 256)
    b1 = _fuse_group_major(q1_b1, q2_b1)                 # (1, 256)

    # block-diagonal final weight: pooled cols [Q1 f0..31 | Q2 f0..31] -> (q1, q2)
    w2 = jnp.zeros((2 * HIDDEN, 2), jnp.float32)
    w2 = w2.at[:HIDDEN, 0].set(q1_w2[:, 0])
    w2 = w2.at[HIDDEN:, 1].set(q2_w2[:, 0])
    b2 = jnp.concatenate([q1_b2, q2_b2], axis=1)         # (1, 2)

    return {
        "enc_w": enc_w.astype(jnp.bfloat16),             # big weight -> bf16 DMA
        "enc_b": enc_b,
        "w1": w1_full[:ENC_OUT].astype(jnp.bfloat16),    # (128, 256) bf16
        "w1_tail": w1_full[ENC_OUT:],                    # (10, 256) f32 (tiny)
        "b1": b1,
        "w2": w2,
        "b2": b2,
    }


if __name__ == "__main__":
    key = jax.random.PRNGKey(0)
    k_obs, k_pick, k_act, k_par = jax.random.split(key, 4)

    obs = jax.random.uniform(k_obs, (B, OBS_C, OBS_H, OBS_W),
                             jnp.float32, 0.0, 255.0)       # NCHW pixel obs
    picker_state = jax.random.uniform(k_pick, (B, 2), jnp.float32)
    action = jax.random.uniform(k_act, (B, ACTION_DIM), jnp.float32, -1.0, 1.0)

    params = init_params(k_par)

    q1, q2 = jax.jit(critic_forward)(params, obs, picker_state, action)
    jax.block_until_ready((q1, q2))

    assert q1.shape == (B, 1) and q2.shape == (B, 1)
    assert bool(jnp.all(jnp.isfinite(q1))) and bool(jnp.all(jnp.isfinite(q2)))
    print("KERNEL_OK")
</pallas_src>

<mosaic_0001>
module attributes {stable_mosaic.version = 11 : i64} {
  func.func @critic_kernel(%arg0: memref<2x1024xf32, #tpu.memory_space<vmem>>, %arg1: memref<2x10xf32, #tpu.memory_space<vmem>>, %arg2: memref<1024x128xbf16, #tpu.memory_space<vmem>>, %arg3: memref<1x128xf32, #tpu.memory_space<vmem>>, %arg4: memref<128x256xbf16, #tpu.memory_space<vmem>>, %arg5: memref<10x256xf32, #tpu.memory_space<vmem>>, %arg6: memref<1x256xf32, #tpu.memory_space<vmem>>, %arg7: memref<64x2xf32, #tpu.memory_space<vmem>>, %arg8: memref<1x2xf32, #tpu.memory_space<vmem>>, %arg9: memref<2x2xf32, #tpu.memory_space<vmem>>) attributes {dimension_semantics = [], scalar_prefetch = 0 : i64, scratch_operands = 0 : i64, tpu.core_type = #tpu.core_type<tc>} {
    %c0 = arith.constant 0 : index
    %c0_0 = arith.constant 0 : index
    %0 = vector.load %arg0[%c0, %c0_0] : memref<2x1024xf32, #tpu.memory_space<vmem>>, vector<2x1024xf32>
    %cst = arith.constant 0.00392156886 : f32
    %1 = vector.broadcast %cst : f32 to vector<2x1024xf32>
    %2 = arith.mulf %0, %1 : vector<2x1024xf32>
    %3 = arith.truncf %2 : vector<2x1024xf32> to vector<2x1024xbf16>
    %c0_1 = arith.constant 0 : index
    %c0_2 = arith.constant 0 : index
    %4 = vector.load %arg2[%c0_1, %c0_2] : memref<1024x128xbf16, #tpu.memory_space<vmem>>, vector<1024x128xbf16>
    %cst_3 = arith.constant dense<0.000000e+00> : vector<2x128xf32>
    %5 = tpu.matmul %3, %4, %cst_3 {dimension_numbers = #tpu.dot_dimension_numbers<[1], [0], [0], [1], [0, 0, 1, 1], [], []>} : vector<2x1024xbf16>, vector<1024x128xbf16>, vector<2x128xf32> -> vector<2x128xf32>
    %c0_4 = arith.constant 0 : index
    %c0_5 = arith.constant 0 : index
    %6 = vector.load %arg3[%c0_4, %c0_5] : memref<1x128xf32, #tpu.memory_space<vmem>>, vector<1x128xf32>
    %7 = vector.broadcast %6 : vector<1x128xf32> to vector<2x128xf32>
    %8 = arith.addf %5, %7 : vector<2x128xf32>
    %cst_6 = arith.constant 0.000000e+00 : f32
    %9 = vector.broadcast %cst_6 : f32 to vector<2x128xf32>
    %10 = arith.maximumf %8, %9 : vector<2x128xf32>
    %11 = arith.truncf %10 : vector<2x128xf32> to vector<2x128xbf16>
    %c0_7 = arith.constant 0 : index
    %c0_8 = arith.constant 0 : index
    %12 = vector.load %arg4[%c0_7, %c0_8] : memref<128x256xbf16, #tpu.memory_space<vmem>>, vector<128x256xbf16>
    %cst_9 = arith.constant dense<0.000000e+00> : vector<2x256xf32>
    %13 = tpu.matmul %11, %12, %cst_9 {dimension_numbers = #tpu.dot_dimension_numbers<[1], [0], [0], [1], [0, 0, 1, 1], [], []>} : vector<2x128xbf16>, vector<128x256xbf16>, vector<2x256xf32> -> vector<2x256xf32>
    %c0_10 = arith.constant 0 : index
    %c0_11 = arith.constant 0 : index
    %14 = vector.load %arg1[%c0_10, %c0_11] : memref<2x10xf32, #tpu.memory_space<vmem>>, vector<2x10xf32>
    %c0_12 = arith.constant 0 : index
    %c0_13 = arith.constant 0 : index
    %15 = vector.load %arg5[%c0_12, %c0_13] : memref<10x256xf32, #tpu.memory_space<vmem>>, vector<10x256xf32>
    %cst_14 = arith.constant dense<0.000000e+00> : vector<2x256xf32>
    %16 = tpu.matmul %14, %15, %cst_14 {dimension_numbers = #tpu.dot_dimension_numbers<[1], [0], [0], [1], [0, 0, 1, 1], [], []>} : vector<2x10xf32>, vector<10x256xf32>, vector<2x256xf32> -> vector<2x256xf32>
    %17 = arith.addf %13, %16 : vector<2x256xf32>
    %c0_15 = arith.constant 0 : index
    %c0_16 = arith.constant 0 : index
    %18 = vector.load %arg6[%c0_15, %c0_16] : memref<1x256xf32, #tpu.memory_space<vmem>>, vector<1x256xf32>
    %19 = vector.broadcast %18 : vector<1x256xf32> to vector<2x256xf32>
    %20 = arith.addf %17, %19 : vector<2x256xf32>
    %cst_17 = arith.constant 0.000000e+00 : f32
    %21 = vector.broadcast %cst_17 : f32 to vector<2x256xf32>
    %22 = arith.maximumf %20, %21 : vector<2x256xf32>
    %23 = vector.extract_strided_slice %22 {offsets = [0, 0], sizes = [2, 128], strides = [1, 1]} : vector<2x256xf32> to vector<2x128xf32>
    %24 = vector.extract_strided_slice %22 {offsets = [0, 128], sizes = [2, 128], strides = [1, 1]} : vector<2x256xf32> to vector<2x128xf32>
    %25 = arith.maximumf %23, %24 : vector<2x128xf32>
    %26 = vector.extract_strided_slice %25 {offsets = [0, 0], sizes = [2, 64], strides = [1, 1]} : vector<2x128xf32> to vector<2x64xf32>
    %27 = vector.extract_strided_slice %25 {offsets = [0, 64], sizes = [2, 64], strides = [1, 1]} : vector<2x128xf32> to vector<2x64xf32>
    %28 = arith.maximumf %26, %27 : vector<2x64xf32>
    %c0_18 = arith.constant 0 : index
    %c0_19 = arith.constant 0 : index
    %29 = vector.load %arg7[%c0_18, %c0_19] : memref<64x2xf32, #tpu.memory_space<vmem>>, vector<64x2xf32>
    %cst_20 = arith.constant dense<0.000000e+00> : vector<2x2xf32>
    %30 = tpu.matmul %28, %29, %cst_20 {dimension_numbers = #tpu.dot_dimension_numbers<[1], [0], [0], [1], [0, 0, 1, 1], [], []>} : vector<2x64xf32>, vector<64x2xf32>, vector<2x2xf32> -> vector<2x2xf32>
    %c0_21 = arith.constant 0 : index
    %c0_22 = arith.constant 0 : index
    %31 = vector.load %arg8[%c0_21, %c0_22] : memref<1x2xf32, #tpu.memory_space<vmem>>, vector<1x2xf32>
    %32 = vector.broadcast %31 : vector<1x2xf32> to vector<2x2xf32>
    %33 = arith.addf %30, %32 : vector<2x2xf32>
    %c0_23 = arith.constant 0 : index
    %c0_24 = arith.constant 0 : index
    %34 = vector.load %arg9[%c0_23, %c0_24] : memref<2x2xf32, #tpu.memory_space<vmem>>, vector<2x2xf32>
    tpu.vector_store %arg9[%c0_23, %c0_24], %33 {strides = array<i32>} : memref<2x2xf32, #tpu.memory_space<vmem>>, vector<2x2xf32>,
    return
  }
}

</mosaic_0001>

<llo_original>
// kernel: critic_forward.1
$region0: #{critic_forward.1}
  #allocation0 [shape = 'u32[]', space=smem, size = 0x4, offset = 0x4, fixed_abs, tag = 'smem constant byte address 0x4 - core index']
  #allocation1 [shape = 'u32[72,128]{1,0:T(1,128)}', space=vmem, size = 0x9000, scoped, tag = 'internal scratch']
  %s0 = inlined_call_operand.vmem [shape: f32[2,1024], index: 0, kind: input, shape index: {}]
  %s1 = inlined_call_operand.vmem [shape: f32[2,10], index: 1, kind: input, shape index: {}]
  %s2 = inlined_call_operand.hbm [shape: bf16[1024,128], index: 2, kind: input, shape index: {}]
  %s3 = inlined_call_operand.vmem [shape: f32[1,128], index: 3, kind: input, shape index: {}]
  %s4 = inlined_call_operand.vmem [shape: bf16[128,256], index: 4, kind: input, shape index: {}]
  %s5 = inlined_call_operand.vmem [shape: f32[10,256], index: 5, kind: input, shape index: {}]
  %s6 = inlined_call_operand.vmem [shape: f32[1,256], index: 6, kind: input, shape index: {}]
  %s7 = inlined_call_operand.vmem [shape: f32[64,2], index: 7, kind: input, shape index: {}]
  %s8 = inlined_call_operand.vmem [shape: f32[1,2], index: 8, kind: input, shape index: {}]
  %s9 = inlined_call_operand.vmem [shape: f32[2,2], index: 9, kind: output, shape index: {}]
  %s10 = sld [smem:[#allocation0]]
  $region50: #{critic_forward.1} parent=0
    _
  %s12 = ssub.s32 1, %s10
  %s13 = scalar_select 0, %s12, %s10
  $region1: #{critic_forward.1} parent=0
    #allocation2 [shape = 'u8[262144]{0}', space=vmem, size = 0x40000, scoped, tag = 'input window, operand 2, single buffered']
    #allocation3 [shape = 's32[1]{0}', space=sflag, size = 0x4, scoped, tag = 'scoped memory for critic_forward.1']
    %14 = vsyncpa [#allocation3], 0
    // Predicated region
    $region2: #{critic_forward.1} parent=1 // pred_check
      _
    $region3: #{critic_forward.1} parent=1 // pred_check_branch
      %16 = sbr.rel (0) target = $region5
    $region4: #{critic_forward.1} parent=1 // pred_region
      _
    $region5: #{critic_forward.1} parent=1 // pred_fallthru
      _
    // Predicated region
    $region6: #{critic_forward.1} parent=1 // pred_check
      _
    $region7: #{critic_forward.1} parent=1 // pred_check_branch
      %18 = sbr.rel (0) target = $region9
    $region8: #{critic_forward.1} parent=1 // pred_region
      _
    $region9: #{critic_forward.1} parent=1 // pred_fallthru
      _
    // Predicated region
    $region10: #{critic_forward.1} parent=1 // pred_check
      _
    $region11: #{critic_forward.1} parent=1 // pred_check_branch
      %20 = sbr.rel (0) target = $region13
    $region12: #{critic_forward.1} parent=1 // pred_region
      %22 = vsyncadd [#allocation3], 0
      %s23 = sshll.u32 %s2, 4
      %s24 = int_to_ptr.hbm [resolvable:$true] %s23
      %s25 = sshll.u32 [#allocation2], 4
      %s26 = int_to_ptr.vmem [resolvable:$true] %s25
      %31 = dma.hbm_to_vmem [thread:$0]  %s24, 8192, %s26, [#allocation3], 64, 64, 4
    $region13: #{critic_forward.1} parent=1 // pred_fallthru
      _
    // Predicated region
    $region14: #{critic_forward.1} parent=1 // pred_check
      _
    $region15: #{critic_forward.1} parent=1 // pred_check_branch
      %33 = sbr.rel (0) target = $region17
    $region16: #{critic_forward.1} parent=1 // pred_region
      _
    $region17: #{critic_forward.1} parent=1 // pred_fallthru
      _
    // Predicated region
    $region18: #{critic_forward.1} parent=1 // pred_check
      _
    $region19: #{critic_forward.1} parent=1 // pred_check_branch
      %35 = sbr.rel (0) target = $region21
    $region20: #{critic_forward.1} parent=1 // pred_region
      _
    $region21: #{critic_forward.1} parent=1 // pred_fallthru
      _
    // Predicated region
    $region22: #{critic_forward.1} parent=1 // pred_check
      _
    $region23: #{critic_forward.1} parent=1 // pred_check_branch
      %37 = sbr.rel (0) target = $region25
    $region24: #{critic_forward.1} parent=1 // pred_region
      _
    $region25: #{critic_forward.1} parent=1 // pred_fallthru
      _
    // Predicated region
    $region26: #{critic_forward.1} parent=1 // pred_check
      _
    $region27: #{critic_forward.1} parent=1 // pred_check_branch
      %39 = sbr.rel (0) target = $region29
    $region28: #{critic_forward.1} parent=1 // pred_region
      _
    $region29: #{critic_forward.1} parent=1 // pred_fallthru
      _
    // Predicated region
    $region30: #{critic_forward.1} parent=1 // pred_check
      _
    $region31: #{critic_forward.1} parent=1 // pred_check_branch
      %41 = sbr.rel (0) target = $region33
    $region32: #{critic_forward.1} parent=1 // pred_region
      _
    $region33: #{critic_forward.1} parent=1 // pred_fallthru
      _
    // Predicated region
    $region34: #{critic_forward.1} parent=1 // pred_check
      _
    $region35: #{critic_forward.1} parent=1 // pred_check_branch
      %43 = sbr.rel (0) target = $region37
    $region36: #{critic_forward.1} parent=1 // pred_region
      _
    $region37: #{critic_forward.1} parent=1 // pred_fallthru
      _
    // Predicated region
    $region38: #{critic_forward.1} parent=1 // pred_check
      _
    $region39: #{critic_forward.1} parent=1 // pred_check_branch
      %45 = sbr.rel (0) target = $region41
    $region40: #{critic_forward.1} parent=1 // pred_region
      %47 = dma.done [#allocation3], 8192
    $region41: #{critic_forward.1} parent=1 // pred_fallthru
      _
    %v48 = vld [vmem:[%s0] sm:$0xff]
    %v49 = vld [vmem:[%s0 + $0x8] sm:$0xff]
    %v50 = vmul.f32 %v48, 0.003921569
    %v51 = vmul.f32 %v49, 0.003921569
    %54 = vst [vmem:[#allocation1] ss:$4 sm:$0xff] %v50
    %s55 = scalar_lea.vmem [#allocation1], 32
    %56 = vst [vmem:[%s55] ss:$4 sm:$0xff] %v51
    %v57 = vld.sshfl [vmem:[#allocation1] sm:$0xff pattern:$0x73625140]
    %v58 = vld.sshfl [vmem:[#allocation1 + $0x8] sm:$0xff pattern:$0x73625140]
    %v59 = vld.sshfl [vmem:[#allocation1 + $0x10] sm:$0xff pattern:$0x73625140]
    %v60 = vld.sshfl [vmem:[#allocation1 + $0x18] sm:$0xff pattern:$0x73625140]
    %v61 = vld.sshfl [vmem:[#allocation1 + $0x20] sm:$0xff pattern:$0x73625140]
    %v62 = vld.sshfl [vmem:[#allocation1 + $0x28] sm:$0xff pattern:$0x73625140]
    %v63 = vld.sshfl [vmem:[#allocation1 + $0x30] sm:$0xff pattern:$0x73625140]
    %v64 = vld.sshfl [vmem:[#allocation1 + $0x38] sm:$0xff pattern:$0x73625140]
    %v73 = vpack.c.bf16 %v57, %v57
    %v74 = vpack.c.bf16 %v58, %v58
    %v75 = vpack.c.bf16 %v59, %v59
    %v76 = vpack.c.bf16 %v60, %v60
    %v77 = vpack.c.bf16 %v61, %v61
    %v78 = vpack.c.bf16 %v62, %v62
    %v79 = vpack.c.bf16 %v63, %v63
    %v80 = vpack.c.bf16 %v64, %v64
    %v81 = vld [vmem:[#allocation2] sm:$0xf]
    %v82 = vld [vmem:[#allocation2 + $0x4] sm:$0xf]
    %v83 = vld [vmem:[#allocation2 + $0x8] sm:$0xf]
    %v84 = vld [vmem:[#allocation2 + $0xc] sm:$0xf]
    %v85 = vld [vmem:[#allocation2 + $0x10] sm:$0xf]
    %v86 = vld [vmem:[#allocation2 + $0x14] sm:$0xf]
    %v87 = vld [vmem:[#allocation2 + $0x18] sm:$0xf]
    %v88 = vld [vmem:[#allocation2 + $0x1c] sm:$0xf]
    %v89 = vld [vmem:[#allocation2 + $0x20] sm:$0xf]
    %v90 = vld [vmem:[#allocation2 + $0x24] sm:$0xf]
    %v91 = vld [vmem:[#allocation2 + $0x28] sm:$0xf]
    %v92 = vld [vmem:[#allocation2 + $0x2c] sm:$0xf]
    %v93 = vld [vmem:[#allocation2 + $0x30] sm:$0xf]
    %v94 = vld [vmem:[#allocation2 + $0x34] sm:$0xf]
    %v95 = vld [vmem:[#allocation2 + $0x38] sm:$0xf]
    %v96 = vld [vmem:[#allocation2 + $0x3c] sm:$0xf]
    %v97 = vld [vmem:[#allocation2 + $0x40] sm:$0xf]
    %v98 = vld [vmem:[#allocation2 + $0x44] sm:$0xf]
    %v99 = vld [vmem:[#allocation2 + $0x48] sm:$0xf]
    %v100 = vld [vmem:[#allocation2 + $0x4c] sm:$0xf]
    %v101 = vld [vmem:[#allocation2 + $0x50] sm:$0xf]
    %v102 = vld [vmem:[#allocation2 + $0x54] sm:$0xf]
    %v103 = vld [vmem:[#allocation2 + $0x58] sm:$0xf]
    %v104 = vld [vmem:[#allocation2 + $0x5c] sm:$0xf]
    %v105 = vld [vmem:[#allocation2 + $0x60] sm:$0xf]
    %v106 = vld [vmem:[#allocation2 + $0x64] sm:$0xf]
    %v107 = vld [vmem:[#allocation2 + $0x68] sm:$0xf]
    %v108 = vld [vmem:[#allocation2 + $0x6c] sm:$0xf]
    %v109 = vld [vmem:[#allocation2 + $0x70] sm:$0xf]
    %v110 = vld [vmem:[#allocation2 + $0x74] sm:$0xf]
    %v111 = vld [vmem:[#allocation2 + $0x78] sm:$0xf]
    %v112 = vld [vmem:[#allocation2 + $0x7c] sm:$0xf]
    %v113 = vld [vmem:[#allocation2 + $0x80] sm:$0xf]
    %v114 = vld [vmem:[#allocation2 + $0x84] sm:$0xf]
    %v115 = vld [vmem:[#allocation2 + $0x88] sm:$0xf]
    %v116 = vld [vmem:[#allocation2 + $0x8c] sm:$0xf]
    %v117 = vld [vmem:[#allocation2 + $0x90] sm:$0xf]
    %v118 = vld [vmem:[#allocation2 + $0x94] sm:$0xf]
    %v119 = vld [vmem:[#allocation2 + $0x98] sm:$0xf]
    %v120 = vld [vmem:[#allocation2 + $0x9c] sm:$0xf]
    %v121 = vld [vmem:[#allocation2 + $0xa0] sm:$0xf]
    %v122 = vld [vmem:[#allocation2 + $0xa4] sm:$0xf]
    %v123 = vld [vmem:[#allocation2 + $0xa8] sm:$0xf]
    %v124 = vld [vmem:[#allocation2 + $0xac] sm:$0xf]
    %v125 = vld [vmem:[#allocation2 + $0xb0] sm:$0xf]
    %v126 = vld [vmem:[#allocation2 + $0xb4] sm:$0xf]
    %v127 = vld [vmem:[#allocation2 + $0xb8] sm:$0xf]
    %v128 = vld [vmem:[#allocation2 + $0xbc] sm:$0xf]
    %v129 = vld [vmem:[#allocation2 + $0xc0] sm:$0xf]
    %v130 = vld [vmem:[#allocation2 + $0xc4] sm:$0xf]
    %v131 = vld [vmem:[#allocation2 + $0xc8] sm:$0xf]
    %v132 = vld [vmem:[#allocation2 + $0xcc] sm:$0xf]
    %v133 = vld [vmem:[#allocation2 + $0xd0] sm:$0xf]
    %v134 = vld [vmem:[#allocation2 + $0xd4] sm:$0xf]
    %v135 = vld [vmem:[#allocation2 + $0xd8] sm:$0xf]
    %v136 = vld [vmem:[#allocation2 + $0xdc] sm:$0xf]
    %v137 = vld [vmem:[#allocation2 + $0xe0] sm:$0xf]
    %v138 = vld [vmem:[#allocation2 + $0xe4] sm:$0xf]
    %v139 = vld [vmem:[#allocation2 + $0xe8] sm:$0xf]
    %v140 = vld [vmem:[#allocation2 + $0xec] sm:$0xf]
    %v141 = vld [vmem:[#allocation2 + $0xf0] sm:$0xf]
    %v142 = vld [vmem:[#allocation2 + $0xf4] sm:$0xf]
    %v143 = vld [vmem:[#allocation2 + $0xf8] sm:$0xf]
    %v144 = vld [vmem:[#allocation2 + $0xfc] sm:$0xf]
    %v145 = vld [vmem:[#allocation2 + $0x100] sm:$0xf]
    %v146 = vld [vmem:[#allocation2 + $0x104] sm:$0xf]
    %v147 = vld [vmem:[#allocation2 + $0x108] sm:$0xf]
    %v148 = vld [vmem:[#allocation2 + $0x10c] sm:$0xf]
    %v149 = vld [vmem:[#allocation2 + $0x110] sm:$0xf]
    %v150 = vld [vmem:[#allocation2 + $0x114] sm:$0xf]
    %v151 = vld [vmem:[#allocation2 + $0x118] sm:$0xf]
    %v152 = vld [vmem:[#allocation2 + $0x11c] sm:$0xf]
    %v153 = vld [vmem:[#allocation2 + $0x120] sm:$0xf]
    %v154 = vld [vmem:[#allocation2 + $0x124] sm:$0xf]
    %v155 = vld [vmem:[#allocation2 + $0x128] sm:$0xf]
    %v156 = vld [vmem:[#allocation2 + $0x12c] sm:$0xf]
    %v157 = vld [vmem:[#allocation2 + $0x130] sm:$0xf]
    %v158 = vld [vmem:[#allocation2 + $0x134] sm:$0xf]
    %v159 = vld [vmem:[#allocation2 + $0x138] sm:$0xf]
    %v160 = vld [vmem:[#allocation2 + $0x13c] sm:$0xf]
    %v161 = vld [vmem:[#allocation2 + $0x140] sm:$0xf]
    %v162 = vld [vmem:[#allocation2 + $0x144] sm:$0xf]
    %v163 = vld [vmem:[#allocation2 + $0x148] sm:$0xf]
    %v164 = vld [vmem:[#allocation2 + $0x14c] sm:$0xf]
    %v165 = vld [vmem:[#allocation2 + $0x150] sm:$0xf]
    %v166 = vld [vmem:[#allocation2 + $0x154] sm:$0xf]
    %v167 = vld [vmem:[#allocation2 + $0x158] sm:$0xf]
    %v168 = vld [vmem:[#allocation2 + $0x15c] sm:$0xf]
    %v169 = vld [vmem:[#allocation2 + $0x160] sm:$0xf]
    %v170 = vld [vmem:[#allocation2 + $0x164] sm:$0xf]
    %v171 = vld [vmem:[#allocation2 + $0x168] sm:$0xf]
    %v172 = vld [vmem:[#allocation2 + $0x16c] sm:$0xf]
    %v173 = vld [vmem:[#allocation2 + $0x170] sm:$0xf]
    %v174 = vld [vmem:[#allocation2 + $0x174] sm:$0xf]
    %v175 = vld [vmem:[#allocation2 + $0x178] sm:$0xf]
    %v176 = vld [vmem:[#allocation2 + $0x17c] sm:$0xf]
    %v177 = vld [vmem:[#allocation2 + $0x180] sm:$0xf]
    %v178 = vld [vmem:[#allocation2 + $0x184] sm:$0xf]
    %v179 = vld [vmem:[#allocation2 + $0x188] sm:$0xf]
    %v180 = vld [vmem:[#allocation2 + $0x18c] sm:$0xf]
    %v181 = vld [vmem:[#allocation2 + $0x190] sm:$0xf]
    %v182 = vld [vmem:[#allocation2 + $0x194] sm:$0xf]
    %v183 = vld [vmem:[#allocation2 + $0x198] sm:$0xf]
    %v184 = vld [vmem:[#allocation2 + $0x19c] sm:$0xf]
    %v185 = vld [vmem:[#allocation2 + $0x1a0] sm:$0xf]
    %v186 = vld [vmem:[#allocation2 + $0x1a4] sm:$0xf]
    %v187 = vld [vmem:[#allocation2 + $0x1a8] sm:$0xf]
    %v188 = vld [vmem:[#allocation2 + $0x1ac] sm:$0xf]
    %v189 = vld [vmem:[#allocation2 + $0x1b0] sm:$0xf]
    %v190 = vld [vmem:[#allocation2 + $0x1b4] sm:$0xf]
    %v191 = vld [vmem:[#allocation2 + $0x1b8] sm:$0xf]
    %v192 = vld [vmem:[#allocation2 + $0x1bc] sm:$0xf]
    %v193 = vld [vmem:[#allocation2 + $0x1c0] sm:$0xf]
    %v194 = vld [vmem:[#allocation2 + $0x1c4] sm:$0xf]
    %v195 = vld [vmem:[#allocation2 + $0x1c8] sm:$0xf]
    %v196 = vld [vmem:[#allocation2 + $0x1cc] sm:$0xf]
    %v197 = vld [vmem:[#allocation2 + $0x1d0] sm:$0xf]
    %v198 = vld [vmem:[#allocation2 + $0x1d4] sm:$0xf]
    %v199 = vld [vmem:[#allocation2 + $0x1d8] sm:$0xf]
    %v200 = vld [vmem:[#allocation2 + $0x1dc] sm:$0xf]
    %v201 = vld [vmem:[#allocation2 + $0x1e0] sm:$0xf]
    %v202 = vld [vmem:[#allocation2 + $0x1e4] sm:$0xf]
    %v203 = vld [vmem:[#allocation2 + $0x1e8] sm:$0xf]
    %v204 = vld [vmem:[#allocation2 + $0x1ec] sm:$0xf]
    %v205 = vld [vmem:[#allocation2 + $0x1f0] sm:$0xf]
    %v206 = vld [vmem:[#allocation2 + $0x1f4] sm:$0xf]
    %v207 = vld [vmem:[#allocation2 + $0x1f8] sm:$0xf]
    %v208 = vld [vmem:[#allocation2 + $0x1fc] sm:$0xf]
    %v209 = vld [vmem:[%s3] sm:$0x1]
    %v211 = vperm.slane %v209, 0
    %v341 = vunpack.c.l.b16 %v81
    %v342 = vunpack.c.l.b16 %v82
    %v343 = vunpack.c.l.b16 %v83
    %v344 = vunpack.c.l.b16 %v84
    %v345 = vunpack.c.l.b16 %v85
    %v346 = vunpack.c.l.b16 %v86
    %v347 = vunpack.c.l.b16 %v87
    %v348 = vunpack.c.l.b16 %v88
    %v349 = vunpack.c.l.b16 %v89
    %v350 = vunpack.c.l.b16 %v90
    %v351 = vunpack.c.l.b16 %v91
    %v352 = vunpack.c.l.b16 %v92
    %v353 = vunpack.c.l.b16 %v93
    %v354 = vunpack.c.l.b16 %v94
    %v355 = vunpack.c.l.b16 %v95
    %v356 = vunpack.c.l.b16 %v96
    %v357 = vunpack.c.l.b16 %v97
    %v358 = vunpack.c.l.b16 %v98
    %v359 = vunpack.c.l.b16 %v99
    %v360 = vunpack.c.l.b16 %v100
    %v361 = vunpack.c.l.b16 %v101
    %v362 = vunpack.c.l.b16 %v102
    %v363 = vunpack.c.l.b16 %v103
    %v364 = vunpack.c.l.b16 %v104
    %v365 = vunpack.c.l.b16 %v105
    %v366 = vunpack.c.l.b16 %v106
    %v367 = vunpack.c.l.b16 %v107
    %v368 = vunpack.c.l.b16 %v108
    %v369 = vunpack.c.l.b16 %v109
    %v370 = vunpack.c.l.b16 %v110
    %v371 = vunpack.c.l.b16 %v111
    %v372 = vunpack.c.l.b16 %v112
    %v373 = vunpack.c.l.b16 %v113
    %v374 = vunpack.c.l.b16 %v114
    %v375 = vunpack.c.l.b16 %v115
    %v376 = vunpack.c.l.b16 %v116
    %v377 = vunpack.c.l.b16 %v117
    %v378 = vunpack.c.l.b16 %v118
    %v379 = vunpack.c.l.b16 %v119
    %v380 = vunpack.c.l.b16 %v120
    %v381 = vunpack.c.l.b16 %v121
    %v382 = vunpack.c.l.b16 %v122
    %v383 = vunpack.c.l.b16 %v123
    %v384 = vunpack.c.l.b16 %v124
    %v385 = vunpack.c.l.b16 %v125
    %v386 = vunpack.c.l.b16 %v126
    %v387 = vunpack.c.l.b16 %v127
    %v388 = vunpack.c.l.b16 %v128
    %v389 = vunpack.c.l.b16 %v129
    %v390 = vunpack.c.l.b16 %v130
    %v391 = vunpack.c.l.b16 %v131
    %v392 = vunpack.c.l.b16 %v132
    %v393 = vunpack.c.l.b16 %v133
    %v394 = vunpack.c.l.b16 %v134
    %v395 = vunpack.c.l.b16 %v135
    %v396 = vunpack.c.l.b16 %v136
    %v397 = vunpack.c.l.b16 %v137
    %v398 = vunpack.c.l.b16 %v138
    %v399 = vunpack.c.l.b16 %v139
    %v400 = vunpack.c.l.b16 %v140
    %v401 = vunpack.c.l.b16 %v141
    %v402 = vunpack.c.l.b16 %v142
    %v403 = vunpack.c.l.b16 %v143
    %v404 = vunpack.c.l.b16 %v144
    %v405 = vunpack.c.l.b16 %v145
    %v406 = vunpack.c.l.b16 %v146
    %v407 = vunpack.c.l.b16 %v147
    %v408 = vunpack.c.l.b16 %v148
    %v409 = vunpack.c.l.b16 %v149
    %v410 = vunpack.c.l.b16 %v150
    %v411 = vunpack.c.l.b16 %v151
    %v412 = vunpack.c.l.b16 %v152
    %v413 = vunpack.c.l.b16 %v153
    %v414 = vunpack.c.l.b16 %v154
    %v415 = vunpack.c.l.b16 %v155
    %v416 = vunpack.c.l.b16 %v156
    %v417 = vunpack.c.l.b16 %v157
    %v418 = vunpack.c.l.b16 %v158
    %v419 = vunpack.c.l.b16 %v159
    %v420 = vunpack.c.l.b16 %v160
    %v421 = vunpack.c.l.b16 %v161
    %v422 = vunpack.c.l.b16 %v162
    %v423 = vunpack.c.l.b16 %v163
    %v424 = vunpack.c.l.b16 %v164
    %v425 = vunpack.c.l.b16 %v165
    %v426 = vunpack.c.l.b16 %v166
    %v427 = vunpack.c.l.b16 %v167
    %v428 = vunpack.c.l.b16 %v168
    %v429 = vunpack.c.l.b16 %v169
    %v430 = vunpack.c.l.b16 %v170
    %v431 = vunpack.c.l.b16 %v171
    %v432 = vunpack.c.l.b16 %v172
    %v433 = vunpack.c.l.b16 %v173
    %v434 = vunpack.c.l.b16 %v174
    %v435 = vunpack.c.l.b16 %v175
    %v436 = vunpack.c.l.b16 %v176
    %v437 = vunpack.c.l.b16 %v177
    %v438 = vunpack.c.l.b16 %v178
    %v439 = vunpack.c.l.b16 %v179
    %v440 = vunpack.c.l.b16 %v180
    %v441 = vunpack.c.l.b16 %v181
    %v442 = vunpack.c.l.b16 %v182
    %v443 = vunpack.c.l.b16 %v183
    %v444 = vunpack.c.l.b16 %v184
    %v445 = vunpack.c.l.b16 %v185
    %v446 = vunpack.c.l.b16 %v186
    %v447 = vunpack.c.l.b16 %v187
    %v448 = vunpack.c.l.b16 %v188
    %v449 = vunpack.c.l.b16 %v189
    %v450 = vunpack.c.l.b16 %v190
    %v451 = vunpack.c.l.b16 %v191
    %v452 = vunpack.c.l.b16 %v192
    %v453 = vunpack.c.l.b16 %v193
    %v454 = vunpack.c.l.b16 %v194
    %v455 = vunpack.c.l.b16 %v195
    %v456 = vunpack.c.l.b16 %v196
    %v457 = vunpack.c.l.b16 %v197
    %v458 = vunpack.c.l.b16 %v198
    %v459 = vunpack.c.l.b16 %v199
    %v460 = vunpack.c.l.b16 %v200
    %v461 = vunpack.c.l.b16 %v201
    %v462 = vunpack.c.l.b16 %v202
    %v463 = vunpack.c.l.b16 %v203
    %v464 = vunpack.c.l.b16 %v204
    %v465 = vunpack.c.l.b16 %v205
    %v466 = vunpack.c.l.b16 %v206
    %v467 = vunpack.c.l.b16 %v207
    %v468 = vunpack.c.l.b16 %v208
    %v469 = vpack.c.b16 %v342, %v341
    %v470 = vpack.c.b16 %v344, %v343
    %v471 = vpack.c.b16 %v346, %v345
    %v472 = vpack.c.b16 %v348, %v347
    %v473 = vpack.c.b16 %v350, %v349
    %v474 = vpack.c.b16 %v352, %v351
    %v475 = vpack.c.b16 %v354, %v353
    %v476 = vpack.c.b16 %v356, %v355
    %v477 = vpack.c.b16 %v358, %v357
    %v478 = vpack.c.b16 %v360, %v359
    %v479 = vpack.c.b16 %v362, %v361
    %v480 = vpack.c.b16 %v364, %v363
    %v481 = vpack.c.b16 %v366, %v365
    %v482 = vpack.c.b16 %v368, %v367
    %v483 = vpack.c.b16 %v370, %v369
    %v484 = vpack.c.b16 %v372, %v371
    %v485 = vpack.c.b16 %v374, %v373
    %v486 = vpack.c.b16 %v376, %v375
    %v487 = vpack.c.b16 %v378, %v377
    %v488 = vpack.c.b16 %v380, %v379
    %v489 = vpack.c.b16 %v382, %v381
    %v490 = vpack.c.b16 %v384, %v383
    %v491 = vpack.c.b16 %v386, %v385
    %v492 = vpack.c.b16 %v388, %v387
    %v493 = vpack.c.b16 %v390, %v389
    %v494 = vpack.c.b16 %v392, %v391
    %v495 = vpack.c.b16 %v394, %v393
    %v496 = vpack.c.b16 %v396, %v395
    %v497 = vpack.c.b16 %v398, %v397
    %v498 = vpack.c.b16 %v400, %v399
    %v499 = vpack.c.b16 %v402, %v401
    %v500 = vpack.c.b16 %v404, %v403
    %v501 = vpack.c.b16 %v406, %v405
    %v502 = vpack.c.b16 %v408, %v407
    %v503 = vpack.c.b16 %v410, %v409
    %v504 = vpack.c.b16 %v412, %v411
    %v505 = vpack.c.b16 %v414, %v413
    %v506 = vpack.c.b16 %v416, %v415
    %v507 = vpack.c.b16 %v418, %v417
    %v508 = vpack.c.b16 %v420, %v419
    %v509 = vpack.c.b16 %v422, %v421
    %v510 = vpack.c.b16 %v424, %v423
    %v511 = vpack.c.b16 %v426, %v425
    %v512 = vpack.c.b16 %v428, %v427
    %v513 = vpack.c.b16 %v430, %v429
    %v514 = vpack.c.b16 %v432, %v431
    %v515 = vpack.c.b16 %v434, %v433
    %v516 = vpack.c.b16 %v436, %v435
    %v517 = vpack.c.b16 %v438, %v437
    %v518 = vpack.c.b16 %v440, %v439
    %v519 = vpack.c.b16 %v442, %v441
    %v520 = vpack.c.b16 %v444, %v443
    %v521 = vpack.c.b16 %v446, %v445
    %v522 = vpack.c.b16 %v448, %v447
    %v523 = vpack.c.b16 %v450, %v449
    %v524 = vpack.c.b16 %v452, %v451
    %v525 = vpack.c.b16 %v454, %v453
    %v526 = vpack.c.b16 %v456, %v455
    %v527 = vpack.c.b16 %v458, %v457
    %v528 = vpack.c.b16 %v460, %v459
    %v529 = vpack.c.b16 %v462, %v461
    %v530 = vpack.c.b16 %v464, %v463
    %v531 = vpack.c.b16 %v466, %v465
    %v532 = vpack.c.b16 %v468, %v467
    %597 = vmatpush.bf16.msra.mxu0 %v476
    %598 = vmatpush.bf16.msra.mxu0 %v475
    %599 = vmatpush.bf16.msra.mxu0 %v474
    %600 = vmatpush.bf16.msra.mxu0 %v473
    %601 = vmatpush.bf16.msra.mxu0 %v472
    %602 = vmatpush.bf16.msra.mxu0 %v471
    %603 = vmatpush.bf16.msra.mxu0 %v470
    %604 = vmatpush.bf16.msra.mxu0 %v469
    %605 = vmatmul.bf16.gmra.mxu0 %v73
    %v606 = vpop.f32.mrf.mxu0
    %v607 = vadd.f32 %v211, %v606
    %v608 = vpop.f32.mrf.mxu0
    %609 = vdwg.mxu0
    %610 = vmatpush.bf16.msra.mxu0 %v484
    %611 = vmatpush.bf16.msra.mxu0 %v483
    %612 = vmatpush.bf16.msra.mxu0 %v482
    %613 = vmatpush.bf16.msra.mxu0 %v481
    %614 = vmatpush.bf16.msra.mxu0 %v480
    %615 = vmatpush.bf16.msra.mxu0 %v479
    %616 = vmatpush.bf16.msra.mxu0 %v478
    %617 = vmatpush.bf16.msra.mxu0 %v477
    %618 = vmatmul.bf16.gmra.mxu0 %v74
    %v619 = vpop.f32.mrf.mxu0
    %v620 = vadd.f32 %v607, %v619
    %v621 = vpop.f32.mrf.mxu0
    %622 = vdwg.mxu0
    %623 = vmatpush.bf16.msra.mxu0 %v492
    %624 = vmatpush.bf16.msra.mxu0 %v491
    %625 = vmatpush.bf16.msra.mxu0 %v490
    %626 = vmatpush.bf16.msra.mxu0 %v489
    %627 = vmatpush.bf16.msra.mxu0 %v488
    %628 = vmatpush.bf16.msra.mxu0 %v487
    %629 = vmatpush.bf16.msra.mxu0 %v486
    %630 = vmatpush.bf16.msra.mxu0 %v485
    %631 = vmatmul.bf16.gmra.mxu0 %v75
    %v632 = vpop.f32.mrf.mxu0
    %v633 = vadd.f32 %v620, %v632
    %v634 = vpop.f32.mrf.mxu0
    %635 = vdwg.mxu0
    %636 = vmatpush.bf16.msra.mxu0 %v500
    %637 = vmatpush.bf16.msra.mxu0 %v499
    %638 = vmatpush.bf16.msra.mxu0 %v498
    %639 = vmatpush.bf16.msra.mxu0 %v497
    %640 = vmatpush.bf16.msra.mxu0 %v496
    %641 = vmatpush.bf16.msra.mxu0 %v495
    %642 = vmatpush.bf16.msra.mxu0 %v494
    %643 = vmatpush.bf16.msra.mxu0 %v493
    %644 = vmatmul.bf16.gmra.mxu0 %v76
    %v645 = vpop.f32.mrf.mxu0
    %v646 = vadd.f32 %v633, %v645
    %v647 = vpop.f32.mrf.mxu0
    %648 = vdwg.mxu0
    %649 = vmatpush.bf16.msra.mxu0 %v508
    %650 = vmatpush.bf16.msra.mxu0 %v507
    %651 = vmatpush.bf16.msra.mxu0 %v506
    %652 = vmatpush.bf16.msra.mxu0 %v505
    %653 = vmatpush.bf16.msra.mxu0 %v504
    %654 = vmatpush.bf16.msra.mxu0 %v503
    %655 = vmatpush.bf16.msra.mxu0 %v502
    %656 = vmatpush.bf16.msra.mxu0 %v501
    %657 = vmatmul.bf16.gmra.mxu0 %v77
    %v658 = vpop.f32.mrf.mxu0
    %v659 = vadd.f32 %v646, %v658
    %v660 = vpop.f32.mrf.mxu0
    %661 = vdwg.mxu0
    %662 = vmatpush.bf16.msra.mxu0 %v516
    %663 = vmatpush.bf16.msra.mxu0 %v515
    %664 = vmatpush.bf16.msra.mxu0 %v514
    %665 = vmatpush.bf16.msra.mxu0 %v513
    %666 = vmatpush.bf16.msra.mxu0 %v512
    %667 = vmatpush.bf16.msra.mxu0 %v511
    %668 = vmatpush.bf16.msra.mxu0 %v510
    %669 = vmatpush.bf16.msra.mxu0 %v509
    %670 = vmatmul.bf16.gmra.mxu0 %v78
    %v671 = vpop.f32.mrf.mxu0
    %v672 = vadd.f32 %v659, %v671
    %v673 = vpop.f32.mrf.mxu0
    %674 = vdwg.mxu0
    %675 = vmatpush.bf16.msra.mxu0 %v524
    %676 = vmatpush.bf16.msra.mxu0 %v523
    %677 = vmatpush.bf16.msra.mxu0 %v522
    %678 = vmatpush.bf16.msra.mxu0 %v521
    %679 = vmatpush.bf16.msra.mxu0 %v520
    %680 = vmatpush.bf16.msra.mxu0 %v519
    %681 = vmatpush.bf16.msra.mxu0 %v518
    %682 = vmatpush.bf16.msra.mxu0 %v517
    %683 = vmatmul.bf16.gmra.mxu0 %v79
    %v684 = vpop.f32.mrf.mxu0
    %v685 = vadd.f32 %v672, %v684
    %v686 = vpop.f32.mrf.mxu0
    %687 = vdwg.mxu0
    %688 = vmatpush.bf16.msra.mxu0 %v532
    %689 = vmatpush.bf16.msra.mxu0 %v531
    %690 = vmatpush.bf16.msra.mxu0 %v530
    %691 = vmatpush.bf16.msra.mxu0 %v529
    %692 = vmatpush.bf16.msra.mxu0 %v528
    %693 = vmatpush.bf16.msra.mxu0 %v527
    %694 = vmatpush.bf16.msra.mxu0 %v526
    %695 = vmatpush.bf16.msra.mxu0 %v525
    %696 = vmatmul.bf16.gmra.mxu0 %v80
    %v697 = vpop.f32.mrf.mxu0
    %v698 = vadd.f32 %v685, %v697
    %v699 = vpop.f32.mrf.mxu0
    %700 = vdwg.mxu0
    %v701 = vmax.f32 %v698, 0.0
    %v702 = vpack.c.bf16 %v701, %v701
    %v703 = vld [vmem:[%s4] sm:$0xff]
    %v704 = vld [vmem:[%s4 + $0x8] sm:$0xff]
    %v705 = vld [vmem:[%s4 + $0x10] sm:$0xff]
    %v706 = vld [vmem:[%s4 + $0x18] sm:$0xff]
    %v707 = vld [vmem:[%s4 + $0x20] sm:$0xff]
    %v708 = vld [vmem:[%s4 + $0x28] sm:$0xff]
    %v709 = vld [vmem:[%s4 + $0x30] sm:$0xff]
    %v710 = vld [vmem:[%s4 + $0x38] sm:$0xff]
    %v711 = vld [vmem:[%s4 + $0x40] sm:$0xff]
    %v712 = vld [vmem:[%s4 + $0x48] sm:$0xff]
    %v713 = vld [vmem:[%s4 + $0x50] sm:$0xff]
    %v714 = vld [vmem:[%s4 + $0x58] sm:$0xff]
    %v715 = vld [vmem:[%s4 + $0x60] sm:$0xff]
    %v716 = vld [vmem:[%s4 + $0x68] sm:$0xff]
    %v717 = vld [vmem:[%s4 + $0x70] sm:$0xff]
    %v718 = vld [vmem:[%s4 + $0x78] sm:$0xff]
    %v719 = vld [vmem:[%s1] sm:$0x3]
    %v720 = vld [vmem:[%s5] sm:$0xff]
    %v721 = vld [vmem:[%s5 + $0x8] sm:$0xff]
    %v722 = vld [vmem:[%s5 + $0x10] sm:$0x3]
    %v723 = vld [vmem:[%s5 + $0x18] sm:$0x3]
    %vm724 = vcmask 80896
    %v726 = vsel %vm724, %v719, 0
    %vm728 = vcmask 1041408
    %v730 = vsel %vm728, %v722, 0
    %v733 = vsel %vm728, %v723, 0
    %735 = vmatpush.msra.mxu0 0.0
    %736 = vmatpush.msra.mxu0 0.0
    %737 = vmatpush.msra.mxu0 0.0
    %738 = vmatpush.msra.mxu0 0.0
    %739 = vmatpush.msra.mxu0 0.0
    %740 = vmatpush.msra.mxu0 0.0
    %741 = vmatpush.msra.mxu0 0.0
    %742 = vmatpush.msra.mxu0 0.0
    %743 = vmatpush.msra.mxu0 0.0
    %744 = vmatpush.msra.mxu0 0.0
    %745 = vmatpush.msra.mxu0 0.0
    %746 = vmatpush.msra.mxu0 0.0
    %747 = vmatpush.msra.mxu0 0.0
    %748 = vmatpush.msra.mxu0 0.0
    %749 = vmatpush.msra.mxu0 %v730
    %750 = vmatpush.msra.mxu0 %v720
    %751 = vmatmul.f32.gmra.mxu0 %v726
    %v752 = vpop.f32.mrf.mxu0
    %v753 = vadd.f32 0.0, %v752
    %754 = vdwg.mxu0
    %755 = vmatpush.msra.mxu0 0.0
    %756 = vmatpush.msra.mxu0 0.0
    %757 = vmatpush.msra.mxu0 0.0
    %758 = vmatpush.msra.mxu0 0.0
    %759 = vmatpush.msra.mxu0 0.0
    %760 = vmatpush.msra.mxu0 0.0
    %761 = vmatpush.msra.mxu0 0.0
    %762 = vmatpush.msra.mxu0 0.0
    %763 = vmatpush.msra.mxu0 0.0
    %764 = vmatpush.msra.mxu0 0.0
    %765 = vmatpush.msra.mxu0 0.0
    %766 = vmatpush.msra.mxu0 0.0
    %767 = vmatpush.msra.mxu0 0.0
    %768 = vmatpush.msra.mxu0 0.0
    %769 = vmatpush.msra.mxu0 %v733
    %770 = vmatpush.msra.mxu0 %v721
    %771 = vmatmul.f32.gmra.mxu0 %v726
    %v772 = vpop.f32.mrf.mxu0
    %v773 = vadd.f32 0.0, %v772
    %774 = vdwg.mxu0
    %v791 = vunpack.c.l.b16 %v703
    %v792 = vunpack.c.h.b16 %v703
    %v793 = vunpack.c.l.b16 %v704
    %v794 = vunpack.c.h.b16 %v704
    %v795 = vunpack.c.l.b16 %v705
    %v796 = vunpack.c.h.b16 %v705
    %v797 = vunpack.c.l.b16 %v706
    %v798 = vunpack.c.h.b16 %v706
    %v799 = vunpack.c.l.b16 %v707
    %v800 = vunpack.c.h.b16 %v707
    %v801 = vunpack.c.l.b16 %v708
    %v802 = vunpack.c.h.b16 %v708
    %v803 = vunpack.c.l.b16 %v709
    %v804 = vunpack.c.h.b16 %v709
    %v805 = vunpack.c.l.b16 %v710
    %v806 = vunpack.c.h.b16 %v710
    %v807 = vunpack.c.l.b16 %v711
    %v808 = vunpack.c.h.b16 %v711
    %v809 = vunpack.c.l.b16 %v712
    %v810 = vunpack.c.h.b16 %v712
    %v811 = vunpack.c.l.b16 %v713
    %v812 = vunpack.c.h.b16 %v713
    %v813 = vunpack.c.l.b16 %v714
    %v814 = vunpack.c.h.b16 %v714
    %v815 = vunpack.c.l.b16 %v715
    %v816 = vunpack.c.h.b16 %v715
    %v817 = vunpack.c.l.b16 %v716
    %v818 = vunpack.c.h.b16 %v716
    %v819 = vunpack.c.l.b16 %v717
    %v820 = vunpack.c.h.b16 %v717
    %v821 = vunpack.c.l.b16 %v718
    %v822 = vunpack.c.h.b16 %v718
    %v823 = vpack.c.b16 %v793, %v791
    %v824 = vpack.c.b16 %v794, %v792
    %v825 = vpack.c.b16 %v797, %v795
    %v826 = vpack.c.b16 %v798, %v796
    %v827 = vpack.c.b16 %v801, %v799
    %v828 = vpack.c.b16 %v802, %v800
    %v829 = vpack.c.b16 %v805, %v803
    %v830 = vpack.c.b16 %v806, %v804
    %v831 = vpack.c.b16 %v809, %v807
    %v832 = vpack.c.b16 %v810, %v808
    %v833 = vpack.c.b16 %v813, %v811
    %v834 = vpack.c.b16 %v814, %v812
    %v835 = vpack.c.b16 %v817, %v815
    %v836 = vpack.c.b16 %v818, %v816
    %v837 = vpack.c.b16 %v821, %v819
    %v838 = vpack.c.b16 %v822, %v820
    %855 = vmatpush.bf16.msra.mxu0 %v837
    %856 = vmatpush.bf16.msra.mxu0 %v835
    %857 = vmatpush.bf16.msra.mxu0 %v833
    %858 = vmatpush.bf16.msra.mxu0 %v831
    %859 = vmatpush.bf16.msra.mxu0 %v829
    %860 = vmatpush.bf16.msra.mxu0 %v827
    %861 = vmatpush.bf16.msra.mxu0 %v825
    %862 = vmatpush.bf16.msra.mxu0 %v823
    %863 = vmatmul.bf16.gmra.mxu0 %v702
    %v864 = vpop.f32.mrf.mxu0
    %v865 = vadd.f32 %v753, %v864
    %v866 = vpop.f32.mrf.mxu0
    %867 = vdwg.mxu0
    %868 = vmatpush.bf16.msra.mxu0 %v838
    %869 = vmatpush.bf16.msra.mxu0 %v836
    %870 = vmatpush.bf16.msra.mxu0 %v834
    %871 = vmatpush.bf16.msra.mxu0 %v832
    %872 = vmatpush.bf16.msra.mxu0 %v830
    %873 = vmatpush.bf16.msra.mxu0 %v828
    %874 = vmatpush.bf16.msra.mxu0 %v826
    %875 = vmatpush.bf16.msra.mxu0 %v824
    %876 = vmatmul.bf16.gmra.mxu0 %v702
    %v877 = vpop.f32.mrf.mxu0
    %v878 = vadd.f32 %v773, %v877
    %v879 = vpop.f32.mrf.mxu0
    %880 = vdwg.mxu0
    %v881 = vld [vmem:[%s6] sm:$0x3]
    %v883 = vperm.slane %v881, 0
    %v884 = vperm.slane %v881, 1
    %v887 = vadd.f32 %v865, %v883
    %v888 = vadd.f32 %v878, %v884
    %v889 = vmax.f32 %v887, 0.0
    %v890 = vmax.f32 %v888, 0.0
    %v891 = vmax.f32 %v889, %v890
    %893 = vrot.lane.b32.xlu0 %v891, 64
    %v894 = vpop.permute.xlu0 %893
    %v896 = vmax.f32 %v891, %v894
    %v897 = vld [vmem:[%s7] sm:$0xff]
    %v898 = vld [vmem:[%s7 + $0x8] sm:$0xff]
    %v899 = vld [vmem:[%s7 + $0x10] sm:$0xff]
    %v900 = vld [vmem:[%s7 + $0x18] sm:$0xff]
    %v901 = vld [vmem:[%s7 + $0x20] sm:$0xff]
    %v902 = vld [vmem:[%s7 + $0x28] sm:$0xff]
    %v903 = vld [vmem:[%s7 + $0x30] sm:$0xff]
    %v904 = vld [vmem:[%s7 + $0x38] sm:$0xff]
    %v905 = vld [vmem:[%s8] sm:$0x1]
    %v907 = vperm.slane %v905, 0
    %vm909 = vcmask 523264
    %v911 = vsel %vm909, %v896, 0
    %913 = vmatpush.msra.mxu0 0.0
    %914 = vmatpush.msra.mxu0 0.0
    %915 = vmatpush.msra.mxu0 0.0
    %916 = vmatpush.msra.mxu0 0.0
    %917 = vmatpush.msra.mxu0 0.0
    %918 = vmatpush.msra.mxu0 0.0
    %919 = vmatpush.msra.mxu0 0.0
    %920 = vmatpush.msra.mxu0 0.0
    %921 = vmatpush.msra.mxu0 %v904
    %922 = vmatpush.msra.mxu0 %v903
    %923 = vmatpush.msra.mxu0 %v902
    %924 = vmatpush.msra.mxu0 %v901
    %925 = vmatpush.msra.mxu0 %v900
    %926 = vmatpush.msra.mxu0 %v899
    %927 = vmatpush.msra.mxu0 %v898
    %928 = vmatpush.msra.mxu0 %v897
    %929 = vmatmul.f32.gmra.mxu0 %v911
    %v930 = vpop.f32.mrf.mxu0
    %v931 = vadd.f32 %v907, %v930
    %932 = vdwg.mxu0
    %vm933 = vcmask 9216
    %934 = vst.msk [vmem:[%s9] sm:$0x3] %vm933, %v931
    // Predicated region
    $region42: #{critic_forward.1} parent=1 // pred_check
      _
    $region43: #{critic_forward.1} parent=1 // pred_check_branch
      %936 = sbr.rel (0) target = $region45
    $region44: #{critic_forward.1} parent=1 // pred_region
      _
    $region45: #{critic_forward.1} parent=1 // pred_fallthru
      _
    // Predicated region
    $region46: #{critic_forward.1} parent=1 // pred_check
      _
    $region47: #{critic_forward.1} parent=1 // pred_check_branch
      %938 = sbr.rel (0) target = $region49
    $region48: #{critic_forward.1} parent=1 // pred_region
      _
    $region49: #{critic_forward.1} parent=1 // pred_fallthru
      _
    %939 = vsyncpa [#allocation3], 1

</llo_original>
